<compile_context>
chip_gen: v6e
topology: v6e:2x2x1
jax: 0.10.0
libtpu: 0.0.40
codegen_flags: <defaults>
</compile_context>

<pallas_src>
import jax
import jax.numpy as jnp
from jax.experimental import pallas as pl
from jax.experimental.pallas import tpu as pltpu


LDJ_LANES = 128  # lane-dense slab for the per-row log-det output


def _round_up(n, m):
    return ((n + m - 1) // m) * m


def _pad2d(a, rows, cols):
    r, c = a.shape
    return jnp.pad(a, ((0, rows - r), (0, cols - c)))


def extended_coupling_kernel(fin_ref, xD_ref, w1_ref, b1_ref,
                             wmu_ref, bmu_ref, wal_ref, bal_ref, c_ref,
                             zD_ref, ldj_ref):
    """Fused coupling block: MLP -> tanh(alpha)*c -> affine transform -> ldj.

    Matmul operands are bf16 (MXU-friendly), accumulation is f32 via
    preferred_element_type; all elementwise ops stay in f32.  Weights arrive
    pre-transposed to (in, out), so no transpose happens in-kernel.
    """
    # Hidden layer: (tm, in_pad) @ (in_pad, H_pad), f32 accumulate, f32 bias.
    h = jnp.dot(fin_ref[...], w1_ref[...],
                preferred_element_type=jnp.float32) + b1_ref[...]
    h = jnp.tanh(h)
    h_bf16 = h.astype(jnp.bfloat16)

    # Output layer split into mu / alpha halves (no masked weights, no .T).
    mu = jnp.dot(h_bf16, wmu_ref[...],
                 preferred_element_type=jnp.float32) + bmu_ref[...]
    a = jnp.dot(h_bf16, wal_ref[...],
                preferred_element_type=jnp.float32) + bal_ref[...]

    # Padded columns of a/c are exactly zero, so alpha padding is zero too.
    alpha = jnp.tanh(a) * c_ref[...]                    # (tm, d_pad), f32
    z_D = xD_ref[...] * jnp.exp(alpha) + mu             # affine coupling

    zD_ref[...] = z_D.astype(zD_ref.dtype)

    # Log-det-Jacobian: per-row sum of alpha; broadcast to a lane-dense slab so
    # the store is a full (unmasked) vst.
    ldj = jnp.sum(alpha, axis=-1, keepdims=True)         # (tm, 1)
    ldj_ref[...] = jnp.broadcast_to(ldj, ldj_ref.shape).astype(ldj_ref.dtype)


def extended_coupling_forward(x, past, params, code_version=3, block_m=256):
    """Forward of ExtendedCoupling with net = Linear -> tanh -> Linear.

    x: (B, D), past: (B, P).  Returns (z: (B, D), ldj: (B,)).
    """
    if code_version < 2:
        # TODO(synk): code_version < 2 (raw alpha_d, no tanh) is not wired into
        # the kernel; only versions 2 and >=3 are supported here.
        raise NotImplementedError("kernel implements code_version >= 2")

    w1, b1 = params["w1"], params["b1"]          # torch layout: (H, d+P), (H,)
    w2, b2 = params["w2"], params["b2"]          # torch layout: (D, H), (D,)
    c_alpha = params.get("c_alpha_d_bias")

    B, D = x.shape
    d = D // 2
    P = past.shape[-1]
    in_full = d + P
    H = w1.shape[0]

    z_d = x[:, :d]
    x_D = x[:, d:]
    full_in = jnp.concatenate([z_d, past], axis=-1)        # (B, d + P)

    if code_version == 2 or c_alpha is None:
        c_vec = jnp.ones((d,), jnp.float32)                # tanh only
    else:
        c_vec = c_alpha.astype(jnp.float32)                # tanh * learned bias

    # ---- pad to TPU-friendly, lane-dense shapes (last % 128, rows % 8) ------
    tm = min(block_m, _round_up(B, 8))
    B_pad = _round_up(B, tm)
    d_pad = _round_up(d, 128)
    in_pad = _round_up(in_full, 128)
    H_pad = _round_up(H, 128)

    fin_p = _pad2d(full_in.astype(jnp.float32), B_pad, in_pad).astype(jnp.bfloat16)
    xD_p = _pad2d(x_D.astype(jnp.float32), B_pad, d_pad)

    # Pre-transpose weights to (in, out); split mu / alpha halves up front.
    w1_p = _pad2d(w1.T.astype(jnp.float32), in_pad, H_pad).astype(jnp.bfloat16)
    b1_p = _pad2d(b1.reshape(1, H).astype(jnp.float32), 1, H_pad)
    wmu_p = _pad2d(w2[:d].T.astype(jnp.float32), H_pad, d_pad).astype(jnp.bfloat16)
    bmu_p = _pad2d(b2[:d].reshape(1, d).astype(jnp.float32), 1, d_pad)
    wal_p = _pad2d(w2[d:].T.astype(jnp.float32), H_pad, d_pad).astype(jnp.bfloat16)
    bal_p = _pad2d(b2[d:].reshape(1, d).astype(jnp.float32), 1, d_pad)
    c_p = _pad2d(c_vec.reshape(1, d), 1, d_pad)

    grid = (B_pad // tm,)

    def row_spec(shape):
        return pl.BlockSpec(shape, lambda i: (i, 0))

    def rep_spec(shape):
        return pl.BlockSpec(shape, lambda i: (0, 0))

    zD_p, ldj_p = pl.pallas_call(
        extended_coupling_kernel,
        out_shape=(
            jax.ShapeDtypeStruct((B_pad, d_pad), x.dtype),
            jax.ShapeDtypeStruct((B_pad, LDJ_LANES), jnp.float32),
        ),
        grid_spec=pltpu.PrefetchScalarGridSpec(
            num_scalar_prefetch=0,
            grid=grid,
            in_specs=[
                row_spec((tm, in_pad)),      # full_in (bf16)
                row_spec((tm, d_pad)),       # x_D (f32)
                rep_spec((in_pad, H_pad)),   # W1^T (bf16)
                rep_spec((1, H_pad)),        # b1 (f32)
                rep_spec((H_pad, d_pad)),    # W_mu^T (bf16)
                rep_spec((1, d_pad)),        # b_mu (f32)
                rep_spec((H_pad, d_pad)),    # W_alpha^T (bf16)
                rep_spec((1, d_pad)),        # b_alpha (f32)
                rep_spec((1, d_pad)),        # c_alpha_d_bias (f32)
            ],
            out_specs=[
                row_spec((tm, d_pad)),
                row_spec((tm, LDJ_LANES)),
            ],
        ),
        compiler_params=pltpu.CompilerParams(
            # batch tiles are independent -> shard across v7x's two TensorCores
            dimension_semantics=("parallel",),
        ),
    )(fin_p, xD_p, w1_p, b1_p, wmu_p, bmu_p, wal_p, bal_p, c_p)

    z_D_out = zD_p[:B, :d]
    ldj = ldj_p[:B, 0]
    z = jnp.concatenate([z_d, z_D_out], axis=-1)
    return z, ldj


def extended_coupling_reference(x, past, params, code_version=3):
    """Pure-JAX reference with the same bf16-operand / f32-accumulate matmuls."""
    w1, b1, w2, b2 = params["w1"], params["b1"], params["w2"], params["b2"]
    B, D = x.shape
    d = D // 2
    z_d, x_D = x[:, :d], x[:, d:]
    full_in = jnp.concatenate([z_d, past], axis=-1)

    h = jnp.tanh(
        jnp.dot(full_in.astype(jnp.bfloat16), w1.T.astype(jnp.bfloat16),
                preferred_element_type=jnp.float32) + b1)
    out = jnp.dot(h.astype(jnp.bfloat16), w2.T.astype(jnp.bfloat16),
                  preferred_element_type=jnp.float32) + b2

    mu_d, alpha_d = out[:, :d], out[:, d:]
    if code_version == 2:
        alpha_d = jnp.tanh(alpha_d)
    elif code_version >= 3:
        alpha_d = jnp.tanh(alpha_d) * params["c_alpha_d_bias"]

    z_D = x_D * jnp.exp(alpha_d) + mu_d
    z = jnp.concatenate([z_d, z_D], axis=-1)
    ldj = jnp.sum(alpha_d, axis=-1)
    return z, ldj


if __name__ == "__main__":
    # Small shapes consistent with the module's forward pass.
    batch = 8
    features = 32          # x: (batch, features); coupling splits 16 | 16
    past_dim = 16          # past: (batch, past_dim)
    hidden = 64            # net hidden width
    code_version = 3
    d = features // 2

    key = jax.random.PRNGKey(0)
    kx, kp, k1, k2, k3, k4, k5 = jax.random.split(key, 7)

    x = jax.random.normal(kx, (batch, features), dtype=jnp.float32)
    past = jax.random.normal(kp, (batch, past_dim), dtype=jnp.float32)

    fan_in1 = d + past_dim
    bound1 = 1.0 / jnp.sqrt(fan_in1)
    bound2 = 1.0 / jnp.sqrt(hidden)
    params = {
        # torch.nn.Linear layout: weight (out_features, in_features)
        "w1": jax.random.uniform(k1, (hidden, fan_in1), jnp.float32, -bound1, bound1),
        "b1": jax.random.uniform(k2, (hidden,), jnp.float32, -bound1, bound1),
        "w2": jax.random.uniform(k3, (features, hidden), jnp.float32, -bound2, bound2),
        "b2": jax.random.uniform(k4, (features,), jnp.float32, -bound2, bound2),
        # torch.rand(net[-1].out_features // 2) -> uniform [0, 1)
        "c_alpha_d_bias": jax.random.uniform(k5, (d,), jnp.float32, 0.0, 1.0),
    }

    z, ldj = extended_coupling_forward(x, past, params, code_version=code_version)
    z, ldj = jax.block_until_ready((z, ldj))

    z_ref, ldj_ref = extended_coupling_reference(
        x, past, params, code_version=code_version)

    assert z.shape == (batch, features)
    assert ldj.shape == (batch,)
    assert jnp.allclose(z, z_ref, atol=1e-4, rtol=1e-4), "z mismatch"
    assert jnp.allclose(ldj, ldj_ref, atol=1e-4, rtol=1e-4), "ldj mismatch"

    print("KERNEL_OK")
</pallas_src>

<mosaic_0001>
module attributes {stable_mosaic.version = 11 : i64} {
  func.func @extended_coupling_kernel(%arg0: i32, %arg1: memref<8x128xbf16, #tpu.memory_space<vmem>>, %arg2: memref<8x128xf32, #tpu.memory_space<vmem>>, %arg3: memref<128x128xbf16, #tpu.memory_space<vmem>>, %arg4: memref<1x128xf32, #tpu.memory_space<vmem>>, %arg5: memref<128x128xbf16, #tpu.memory_space<vmem>>, %arg6: memref<1x128xf32, #tpu.memory_space<vmem>>, %arg7: memref<128x128xbf16, #tpu.memory_space<vmem>>, %arg8: memref<1x128xf32, #tpu.memory_space<vmem>>, %arg9: memref<1x128xf32, #tpu.memory_space<vmem>>, %arg10: memref<8x128xf32, #tpu.memory_space<vmem>>, %arg11: memref<8x128xf32, #tpu.memory_space<vmem>>) attributes {dimension_semantics = [#tpu.dimension_semantics<parallel>], iteration_bounds = array<i64: 1>, scalar_prefetch = 0 : i64, scratch_operands = 0 : i64, tpu.core_type = #tpu.core_type<tc>, window_params = [{transform_indices = @transform_0, window_bounds = array<i64: 8, 128>}, {transform_indices = @transform_1, window_bounds = array<i64: 8, 128>}, {pipeline_mode = #tpu.pipeline_mode<synchronous>, transform_indices = @transform_2, window_bounds = array<i64: 128, 128>}, {pipeline_mode = #tpu.pipeline_mode<synchronous>, transform_indices = @transform_3, window_bounds = array<i64: 1, 128>}, {pipeline_mode = #tpu.pipeline_mode<synchronous>, transform_indices = @transform_4, window_bounds = array<i64: 128, 128>}, {pipeline_mode = #tpu.pipeline_mode<synchronous>, transform_indices = @transform_5, window_bounds = array<i64: 1, 128>}, {pipeline_mode = #tpu.pipeline_mode<synchronous>, transform_indices = @transform_6, window_bounds = array<i64: 128, 128>}, {pipeline_mode = #tpu.pipeline_mode<synchronous>, transform_indices = @transform_7, window_bounds = array<i64: 1, 128>}, {pipeline_mode = #tpu.pipeline_mode<synchronous>, transform_indices = @transform_8, window_bounds = array<i64: 1, 128>}, {transform_indices = @transform_9, window_bounds = array<i64: 8, 128>}, {transform_indices = @transform_10, window_bounds = array<i64: 8, 128>}]} {
    %c0 = arith.constant 0 : index
    %c0_0 = arith.constant 0 : index
    %0 = vector.load %arg1[%c0, %c0_0] : memref<8x128xbf16, #tpu.memory_space<vmem>>, vector<8x128xbf16>
    %c0_1 = arith.constant 0 : index
    %c0_2 = arith.constant 0 : index
    %1 = vector.load %arg3[%c0_1, %c0_2] : memref<128x128xbf16, #tpu.memory_space<vmem>>, vector<128x128xbf16>
    %cst = arith.constant dense<0.000000e+00> : vector<8x128xf32>
    %2 = tpu.matmul %0, %1, %cst {dimension_numbers = #tpu.dot_dimension_numbers<[1], [0], [0], [1], [0, 0, 1, 1], [], []>} : vector<8x128xbf16>, vector<128x128xbf16>, vector<8x128xf32> -> vector<8x128xf32>
    %c0_3 = arith.constant 0 : index
    %c0_4 = arith.constant 0 : index
    %3 = vector.load %arg4[%c0_3, %c0_4] : memref<1x128xf32, #tpu.memory_space<vmem>>, vector<1x128xf32>
    %4 = vector.broadcast %3 : vector<1x128xf32> to vector<8x128xf32>
    %5 = arith.addf %2, %4 : vector<8x128xf32>
    %6 = math.tanh %5 : vector<8x128xf32>
    %7 = arith.truncf %6 : vector<8x128xf32> to vector<8x128xbf16>
    %c0_5 = arith.constant 0 : index
    %c0_6 = arith.constant 0 : index
    %8 = vector.load %arg5[%c0_5, %c0_6] : memref<128x128xbf16, #tpu.memory_space<vmem>>, vector<128x128xbf16>
    %cst_7 = arith.constant dense<0.000000e+00> : vector<8x128xf32>
    %9 = tpu.matmul %7, %8, %cst_7 {dimension_numbers = #tpu.dot_dimension_numbers<[1], [0], [0], [1], [0, 0, 1, 1], [], []>} : vector<8x128xbf16>, vector<128x128xbf16>, vector<8x128xf32> -> vector<8x128xf32>
    %c0_8 = arith.constant 0 : index
    %c0_9 = arith.constant 0 : index
    %10 = vector.load %arg6[%c0_8, %c0_9] : memref<1x128xf32, #tpu.memory_space<vmem>>, vector<1x128xf32>
    %11 = vector.broadcast %10 : vector<1x128xf32> to vector<8x128xf32>
    %12 = arith.addf %9, %11 : vector<8x128xf32>
    %c0_10 = arith.constant 0 : index
    %c0_11 = arith.constant 0 : index
    %13 = vector.load %arg7[%c0_10, %c0_11] : memref<128x128xbf16, #tpu.memory_space<vmem>>, vector<128x128xbf16>
    %cst_12 = arith.constant dense<0.000000e+00> : vector<8x128xf32>
    %14 = tpu.matmul %7, %13, %cst_12 {dimension_numbers = #tpu.dot_dimension_numbers<[1], [0], [0], [1], [0, 0, 1, 1], [], []>} : vector<8x128xbf16>, vector<128x128xbf16>, vector<8x128xf32> -> vector<8x128xf32>
    %c0_13 = arith.constant 0 : index
    %c0_14 = arith.constant 0 : index
    %15 = vector.load %arg8[%c0_13, %c0_14] : memref<1x128xf32, #tpu.memory_space<vmem>>, vector<1x128xf32>
    %16 = vector.broadcast %15 : vector<1x128xf32> to vector<8x128xf32>
    %17 = arith.addf %14, %16 : vector<8x128xf32>
    %18 = math.tanh %17 : vector<8x128xf32>
    %c0_15 = arith.constant 0 : index
    %c0_16 = arith.constant 0 : index
    %19 = vector.load %arg9[%c0_15, %c0_16] : memref<1x128xf32, #tpu.memory_space<vmem>>, vector<1x128xf32>
    %20 = vector.broadcast %19 : vector<1x128xf32> to vector<8x128xf32>
    %21 = arith.mulf %18, %20 : vector<8x128xf32>
    %c0_17 = arith.constant 0 : index
    %c0_18 = arith.constant 0 : index
    %22 = vector.load %arg2[%c0_17, %c0_18] : memref<8x128xf32, #tpu.memory_space<vmem>>, vector<8x128xf32>
    %23 = math.exp %21 : vector<8x128xf32>
    %24 = arith.mulf %22, %23 : vector<8x128xf32>
    %25 = arith.addf %24, %12 : vector<8x128xf32>
    %c0_19 = arith.constant 0 : index
    %c0_20 = arith.constant 0 : index
    %26 = vector.load %arg10[%c0_19, %c0_20] : memref<8x128xf32, #tpu.memory_space<vmem>>, vector<8x128xf32>
    tpu.vector_store %arg10[%c0_19, %c0_20], %25 {strides = array<i32>} : memref<8x128xf32, #tpu.memory_space<vmem>>, vector<8x128xf32>,
    %cst_21 = arith.constant dense<0.000000e+00> : vector<8xf32>
    %27 = vector.multi_reduction <add>, %21, %cst_21 [1] : vector<8x128xf32> to vector<8xf32>
    %28 = vector.shape_cast %27 : vector<8xf32> to vector<8x1xf32>
    %29 = vector.shape_cast %28 : vector<8x1xf32> to vector<8x1xf32>
    %30 = vector.broadcast %29 : vector<8x1xf32> to vector<8x128xf32>
    %c0_22 = arith.constant 0 : index
    %c0_23 = arith.constant 0 : index
    %31 = vector.load %arg11[%c0_22, %c0_23] : memref<8x128xf32, #tpu.memory_space<vmem>>, vector<8x128xf32>
    tpu.vector_store %arg11[%c0_22, %c0_23], %30 {strides = array<i32>} : memref<8x128xf32, #tpu.memory_space<vmem>>, vector<8x128xf32>,
    return
  }
  func.func @transform_0(%arg0: i32) -> (i32, i32) {
    %c0_i32 = arith.constant 0 : i32
    %c0_i32_0 = arith.constant 0 : i32
    return %arg0, %c0_i32 : i32, i32
  }
  func.func @transform_1(%arg0: i32) -> (i32, i32) {
    %c0_i32 = arith.constant 0 : i32
    %c0_i32_0 = arith.constant 0 : i32
    return %arg0, %c0_i32 : i32, i32
  }
  func.func @transform_2(%arg0: i32) -> (i32, i32) {
    %c0_i32 = arith.constant 0 : i32
    %c0_i32_0 = arith.constant 0 : i32
    %c0_i32_1 = arith.constant 0 : i32
    return %c0_i32, %c0_i32_0 : i32, i32
  }
  func.func @transform_3(%arg0: i32) -> (i32, i32) {
    %c0_i32 = arith.constant 0 : i32
    %c0_i32_0 = arith.constant 0 : i32
    %c0_i32_1 = arith.constant 0 : i32
    return %c0_i32, %c0_i32_0 : i32, i32
  }
  func.func @transform_4(%arg0: i32) -> (i32, i32) {
    %c0_i32 = arith.constant 0 : i32
    %c0_i32_0 = arith.constant 0 : i32
    %c0_i32_1 = arith.constant 0 : i32
    return %c0_i32, %c0_i32_0 : i32, i32
  }
  func.func @transform_5(%arg0: i32) -> (i32, i32) {
    %c0_i32 = arith.constant 0 : i32
    %c0_i32_0 = arith.constant 0 : i32
    %c0_i32_1 = arith.constant 0 : i32
    return %c0_i32, %c0_i32_0 : i32, i32
  }
  func.func @transform_6(%arg0: i32) -> (i32, i32) {
    %c0_i32 = arith.constant 0 : i32
    %c0_i32_0 = arith.constant 0 : i32
    %c0_i32_1 = arith.constant 0 : i32
    return %c0_i32, %c0_i32_0 : i32, i32
  }
  func.func @transform_7(%arg0: i32) -> (i32, i32) {
    %c0_i32 = arith.constant 0 : i32
    %c0_i32_0 = arith.constant 0 : i32
    %c0_i32_1 = arith.constant 0 : i32
    return %c0_i32, %c0_i32_0 : i32, i32
  }
  func.func @transform_8(%arg0: i32) -> (i32, i32) {
    %c0_i32 = arith.constant 0 : i32
    %c0_i32_0 = arith.constant 0 : i32
    %c0_i32_1 = arith.constant 0 : i32
    return %c0_i32, %c0_i32_0 : i32, i32
  }
  func.func @transform_9(%arg0: i32) -> (i32, i32) {
    %c0_i32 = arith.constant 0 : i32
    %c0_i32_0 = arith.constant 0 : i32
    return %arg0, %c0_i32 : i32, i32
  }
  func.func @transform_10(%arg0: i32) -> (i32, i32) {
    %c0_i32 = arith.constant 0 : i32
    %c0_i32_0 = arith.constant 0 : i32
    return %arg0, %c0_i32 : i32, i32
  }
}

</mosaic_0001>

<llo_original>
// kernel: tpu_custom_call.1
$region0: #{tpu_custom_call.1}
  #allocation0 [shape = 'u32[]', space=smem, size = 0x4, offset = 0x4, fixed_abs, tag = 'smem constant byte address 0x4 - core index']
  #allocation1 [shape = 'u32[144,128]{1,0:T(1,128)}', space=vmem, size = 0x12000, scoped, tag = 'internal scratch']
  %s0 = inlined_call_operand.hbm [shape: bf16[8,128], index: 0, kind: input, shape index: {}]
  %s1 = inlined_call_operand.hbm [shape: f32[8,128], index: 1, kind: input, shape index: {}]
  %s2 = inlined_call_operand.hbm [shape: bf16[128,128], index: 2, kind: input, shape index: {}]
  %s3 = inlined_call_operand.vmem [shape: f32[1,128], index: 3, kind: input, shape index: {}]
  %s4 = inlined_call_operand.hbm [shape: bf16[128,128], index: 4, kind: input, shape index: {}]
  %s5 = inlined_call_operand.vmem [shape: f32[1,128], index: 5, kind: input, shape index: {}]
  %s6 = inlined_call_operand.hbm [shape: bf16[128,128], index: 6, kind: input, shape index: {}]
  %s7 = inlined_call_operand.vmem [shape: f32[1,128], index: 7, kind: input, shape index: {}]
  %s8 = inlined_call_operand.vmem [shape: f32[1,128], index: 8, kind: input, shape index: {}]
  %s9 = inlined_call_operand.hbm [shape: f32[8,128], index: 9, kind: output, shape index: {0}]
  %s10 = inlined_call_operand.hbm [shape: f32[8,128], index: 10, kind: output, shape index: {1}]
  %11 = xla_tuple %s9, %s10
  %s12 = sld [smem:[#allocation0]]
  $region74: #{tpu_custom_call.1} parent=0
    _
  %s14 = ssub.s32 1, %s12
  %s15 = scalar_select 0, %s14, %s12
  $region1: #{tpu_custom_call.1} parent=0
    #allocation2 [shape = 'u8[2048]{0}', space=vmem, size = 0x800, scoped, tag = 'input window, operand 0, single buffered']
    #allocation3 [shape = 's32[1]{0}', space=sflag, size = 0x4, scoped, tag = 'scoped memory for tpu_custom_call.1']
    #allocation4 [shape = 's32[1]{0}', space=sflag, size = 0x4, scoped, tag = 'scoped memory for tpu_custom_call.1']
    #allocation5 [shape = 'u8[4096]{0}', space=vmem, size = 0x1000, scoped, tag = 'input window, operand 1, single buffered']
    #allocation6 [shape = 's32[1]{0}', space=sflag, size = 0x4, scoped, tag = 'scoped memory for tpu_custom_call.1']
    #allocation7 [shape = 'u8[32768]{0}', space=vmem, size = 0x8000, scoped, tag = 'input window, operand 2, single buffered']
    #allocation8 [shape = 'u8[32768]{0}', space=vmem, size = 0x8000, scoped, tag = 'input window, operand 4, single buffered']
    #allocation9 [shape = 's32[1]{0}', space=sflag, size = 0x4, scoped, tag = 'scoped memory for tpu_custom_call.1']
    #allocation10 [shape = 'u8[32768]{0}', space=vmem, size = 0x8000, scoped, tag = 'input window, operand 6, single buffered']
    #allocation11 [shape = 'u8[4096]{0}', space=vmem, size = 0x1000, scoped, tag = 'output window, operand 0, single buffered']
    #allocation12 [shape = 'u8[4096]{0}', space=vmem, size = 0x1000, scoped, tag = 'output window, operand 1, single buffered']
    #allocation13 [shape = 's32[1]{0}', space=sflag, size = 0x4, scoped, tag = 'scoped memory for tpu_custom_call.1']
    %16 = vsyncpa [#allocation3], 0
    %17 = vsyncpa [#allocation6], 0
    %18 = vsyncpa [#allocation9], 0
    %19 = vsyncpa [#allocation4], 0
    %20 = vsyncpa [#allocation13], 0
    // Predicated region
    $region2: #{tpu_custom_call.1} parent=1 // pred_check
      _
    $region3: #{tpu_custom_call.1} parent=1 // pred_check_branch
      %22 = sbr.rel (0) target = $region5
    $region4: #{tpu_custom_call.1} parent=1 // pred_region
      %s24 = ssub.s32 64, 64
      %25 = vsyncadd [#allocation3], %s24
      %s27 = sshll.u32 [#allocation2], 4
      %s28 = int_to_ptr.vmem [resolvable:$true] %s27
      %30 = dma.hbm_to_vmem [thread:$0]  %s0, 64, %s28, [#allocation3]
    $region5: #{tpu_custom_call.1} parent=1 // pred_fallthru
      _
    // Predicated region
    $region6: #{tpu_custom_call.1} parent=1 // pred_check
      _
    $region7: #{tpu_custom_call.1} parent=1 // pred_check_branch
      %32 = sbr.rel (0) target = $region9
    $region8: #{tpu_custom_call.1} parent=1 // pred_region
      %s34 = ssub.s32 128, 128
      %35 = vsyncadd [#allocation6], %s34
      %s37 = sshll.u32 [#allocation5], 4
      %s38 = int_to_ptr.vmem [resolvable:$true] %s37
      %40 = dma.hbm_to_vmem [thread:$0]  %s1, 128, %s38, [#allocation6]
    $region9: #{tpu_custom_call.1} parent=1 // pred_fallthru
      _
    // Predicated region
    $region10: #{tpu_custom_call.1} parent=1 // pred_check
      _
    $region11: #{tpu_custom_call.1} parent=1 // pred_check_branch
      %42 = sbr.rel (0) target = $region13
    $region12: #{tpu_custom_call.1} parent=1 // pred_region
      %s44 = ssub.s32 1024, 1024
      %45 = vsyncadd [#allocation6], %s44
      %s46 = sshll.u32 [#allocation7], 4
      %s47 = int_to_ptr.vmem [resolvable:$true] %s46
      %52 = dma.hbm_to_vmem [thread:$0]  %s2, 1024, %s47, [#allocation6], 64, 64, 4
    $region13: #{tpu_custom_call.1} parent=1 // pred_fallthru
      _
    // Predicated region
    $region14: #{tpu_custom_call.1} parent=1 // pred_check
      _
    $region15: #{tpu_custom_call.1} parent=1 // pred_check_branch
      %54 = sbr.rel (0) target = $region17
    $region16: #{tpu_custom_call.1} parent=1 // pred_region
      _
    $region17: #{tpu_custom_call.1} parent=1 // pred_fallthru
      _
    // Predicated region
    $region18: #{tpu_custom_call.1} parent=1 // pred_check
      _
    $region19: #{tpu_custom_call.1} parent=1 // pred_check_branch
      %56 = sbr.rel (0) target = $region21
    $region20: #{tpu_custom_call.1} parent=1 // pred_region
      %s58 = ssub.s32 1024, 1024
      %59 = vsyncadd [#allocation9], %s58
      %s60 = sshll.u32 [#allocation8], 4
      %s61 = int_to_ptr.vmem [resolvable:$true] %s60
      %66 = dma.hbm_to_vmem [thread:$0]  %s4, 1024, %s61, [#allocation9], 64, 64, 4
    $region21: #{tpu_custom_call.1} parent=1 // pred_fallthru
      _
    // Predicated region
    $region22: #{tpu_custom_call.1} parent=1 // pred_check
      _
    $region23: #{tpu_custom_call.1} parent=1 // pred_check_branch
      %68 = sbr.rel (0) target = $region25
    $region24: #{tpu_custom_call.1} parent=1 // pred_region
      _
    $region25: #{tpu_custom_call.1} parent=1 // pred_fallthru
      _
    // Predicated region
    $region26: #{tpu_custom_call.1} parent=1 // pred_check
      _
    $region27: #{tpu_custom_call.1} parent=1 // pred_check_branch
      %70 = sbr.rel (0) target = $region29
    $region28: #{tpu_custom_call.1} parent=1 // pred_region
      %s72 = ssub.s32 1024, 1024
      %73 = vsyncadd [#allocation9], %s72
      %s74 = sshll.u32 [#allocation10], 4
      %s75 = int_to_ptr.vmem [resolvable:$true] %s74
      %80 = dma.hbm_to_vmem [thread:$0]  %s6, 1024, %s75, [#allocation9], 64, 64, 4
    $region29: #{tpu_custom_call.1} parent=1 // pred_fallthru
      _
    // Predicated region
    $region30: #{tpu_custom_call.1} parent=1 // pred_check
      _
    $region31: #{tpu_custom_call.1} parent=1 // pred_check_branch
      %82 = sbr.rel (0) target = $region33
    $region32: #{tpu_custom_call.1} parent=1 // pred_region
      _
    $region33: #{tpu_custom_call.1} parent=1 // pred_fallthru
      _
    // Predicated region
    $region34: #{tpu_custom_call.1} parent=1 // pred_check
      _
    $region35: #{tpu_custom_call.1} parent=1 // pred_check_branch
      %84 = sbr.rel (0) target = $region37
    $region36: #{tpu_custom_call.1} parent=1 // pred_region
      _
    $region37: #{tpu_custom_call.1} parent=1 // pred_fallthru
      _
    // Predicated region
    $region38: #{tpu_custom_call.1} parent=1 // pred_check
      _
    $region39: #{tpu_custom_call.1} parent=1 // pred_check_branch
      %86 = sbr.rel (0) target = $region41
    $region40: #{tpu_custom_call.1} parent=1 // pred_region
      %87 = dma.done [#allocation3], 64
    $region41: #{tpu_custom_call.1} parent=1 // pred_fallthru
      _
    // Predicated region
    $region42: #{tpu_custom_call.1} parent=1 // pred_check
      _
    $region43: #{tpu_custom_call.1} parent=1 // pred_check_branch
      %89 = sbr.rel (0) target = $region45
    $region44: #{tpu_custom_call.1} parent=1 // pred_region
      %90 = dma.done [#allocation6], 128
    $region45: #{tpu_custom_call.1} parent=1 // pred_fallthru
      _
    // Predicated region
    $region46: #{tpu_custom_call.1} parent=1 // pred_check
      _
    $region47: #{tpu_custom_call.1} parent=1 // pred_check_branch
      %92 = sbr.rel (0) target = $region49
    $region48: #{tpu_custom_call.1} parent=1 // pred_region
      %93 = dma.done [#allocation6], 1024
    $region49: #{tpu_custom_call.1} parent=1 // pred_fallthru
      _
    // Predicated region
    $region50: #{tpu_custom_call.1} parent=1 // pred_check
      _
    $region51: #{tpu_custom_call.1} parent=1 // pred_check_branch
      %95 = sbr.rel (0) target = $region53
    $region52: #{tpu_custom_call.1} parent=1 // pred_region
      %96 = dma.done [#allocation9], 1024
    $region53: #{tpu_custom_call.1} parent=1 // pred_fallthru
      _
    // Predicated region
    $region54: #{tpu_custom_call.1} parent=1 // pred_check
      _
    $region55: #{tpu_custom_call.1} parent=1 // pred_check_branch
      %98 = sbr.rel (0) target = $region57
    $region56: #{tpu_custom_call.1} parent=1 // pred_region
      %99 = dma.done [#allocation9], 1024
    $region57: #{tpu_custom_call.1} parent=1 // pred_fallthru
      _
    %v101 = vld [vmem:[#allocation2] sm:$0xf]
    %v102 = vld [vmem:[#allocation7] sm:$0xf]
    %v103 = vld [vmem:[#allocation7 + $0x4] sm:$0xf]
    %v104 = vld [vmem:[#allocation7 + $0x8] sm:$0xf]
    %v105 = vld [vmem:[#allocation7 + $0xc] sm:$0xf]
    %v106 = vld [vmem:[#allocation7 + $0x10] sm:$0xf]
    %v107 = vld [vmem:[#allocation7 + $0x14] sm:$0xf]
    %v108 = vld [vmem:[#allocation7 + $0x18] sm:$0xf]
    %v109 = vld [vmem:[#allocation7 + $0x1c] sm:$0xf]
    %v110 = vld [vmem:[#allocation7 + $0x20] sm:$0xf]
    %v111 = vld [vmem:[#allocation7 + $0x24] sm:$0xf]
    %v112 = vld [vmem:[#allocation7 + $0x28] sm:$0xf]
    %v113 = vld [vmem:[#allocation7 + $0x2c] sm:$0xf]
    %v114 = vld [vmem:[#allocation7 + $0x30] sm:$0xf]
    %v115 = vld [vmem:[#allocation7 + $0x34] sm:$0xf]
    %v116 = vld [vmem:[#allocation7 + $0x38] sm:$0xf]
    %v117 = vld [vmem:[#allocation7 + $0x3c] sm:$0xf]
    %v118 = vld [vmem:[%s3] sm:$0x1]
    %v120 = vlaneseq
    %v121 = vshrl.u32 %v120, 7
    %v122 = vsub.s32 0, %v121
    %v123 = vrot.slane %v118, %v122
    %v141 = vunpack.c.l.b16 %v102
    %v142 = vunpack.c.l.b16 %v103
    %v143 = vunpack.c.l.b16 %v104
    %v144 = vunpack.c.l.b16 %v105
    %v145 = vunpack.c.l.b16 %v106
    %v146 = vunpack.c.l.b16 %v107
    %v147 = vunpack.c.l.b16 %v108
    %v148 = vunpack.c.l.b16 %v109
    %v149 = vunpack.c.l.b16 %v110
    %v150 = vunpack.c.l.b16 %v111
    %v151 = vunpack.c.l.b16 %v112
    %v152 = vunpack.c.l.b16 %v113
    %v153 = vunpack.c.l.b16 %v114
    %v154 = vunpack.c.l.b16 %v115
    %v155 = vunpack.c.l.b16 %v116
    %v156 = vunpack.c.l.b16 %v117
    %v157 = vpack.c.b16 %v142, %v141
    %v158 = vpack.c.b16 %v144, %v143
    %v159 = vpack.c.b16 %v146, %v145
    %v160 = vpack.c.b16 %v148, %v147
    %v161 = vpack.c.b16 %v150, %v149
    %v162 = vpack.c.b16 %v152, %v151
    %v163 = vpack.c.b16 %v154, %v153
    %v164 = vpack.c.b16 %v156, %v155
    %173 = vmatprep.subr.bf16.mxu0 0
    %174 = vmatpush1.bf16.msra.mxu0 %v164
    %175 = vmatprep.subr.bf16.mxu0 0
    %176 = vmatpush1.bf16.msra.mxu0 %v163
    %177 = vmatprep.subr.bf16.mxu0 0
    %178 = vmatpush1.bf16.msra.mxu0 %v162
    %179 = vmatprep.subr.bf16.mxu0 0
    %180 = vmatpush1.bf16.msra.mxu0 %v161
    %181 = vmatprep.subr.bf16.mxu0 0
    %182 = vmatpush1.bf16.msra.mxu0 %v160
    %183 = vmatprep.subr.bf16.mxu0 0
    %184 = vmatpush1.bf16.msra.mxu0 %v159
    %185 = vmatprep.subr.bf16.mxu0 0
    %186 = vmatpush1.bf16.msra.mxu0 %v158
    %187 = vmatprep.subr.bf16.mxu0 0
    %188 = vmatpush1.bf16.msra.mxu0 %v157
    %189 = vmatprep.subr.bf16.mxu0 0
    %190 = vmatpush2.bf16.msra.mxu0 0
    %191 = vmatprep.subr.bf16.mxu0 0
    %192 = vmatpush2.bf16.msra.mxu0 0
    %193 = vmatprep.subr.bf16.mxu0 0
    %194 = vmatpush2.bf16.msra.mxu0 0
    %195 = vmatprep.subr.bf16.mxu0 0
    %196 = vmatpush2.bf16.msra.mxu0 0
    %197 = vmatprep.subr.bf16.mxu0 0
    %198 = vmatpush2.bf16.msra.mxu0 0
    %199 = vmatprep.subr.bf16.mxu0 0
    %200 = vmatpush2.bf16.msra.mxu0 0
    %201 = vmatprep.subr.bf16.mxu0 0
    %202 = vmatpush2.bf16.msra.mxu0 0
    %203 = vmatprep.subr.bf16.mxu0 0
    %204 = vmatpush2.bf16.msra.mxu0 0
    %205 = vmatprep.mubr.bf16.mxu0 0
    %206 = vmatmul.mubr.bf16.gmra.mxu0 %v101
    %v207 = vpop.f32.mrf.mxu0
    %v208 = vadd.f32 %v123, %v207
    %v209 = vpop.f32.mrf.mxu0
    %v210 = vpop.f32.mrf.mxu0
    %v211 = vpop.f32.mrf.mxu0
    %212 = vdwg.mxu0
    %v213 = vtanh.pop %v208
    %v214 = vpack.c.bf16 %v213, %v213
    %v215 = vld [vmem:[#allocation8] sm:$0xf]
    %v216 = vld [vmem:[#allocation8 + $0x4] sm:$0xf]
    %v217 = vld [vmem:[#allocation8 + $0x8] sm:$0xf]
    %v218 = vld [vmem:[#allocation8 + $0xc] sm:$0xf]
    %v219 = vld [vmem:[#allocation8 + $0x10] sm:$0xf]
    %v220 = vld [vmem:[#allocation8 + $0x14] sm:$0xf]
    %v221 = vld [vmem:[#allocation8 + $0x18] sm:$0xf]
    %v222 = vld [vmem:[#allocation8 + $0x1c] sm:$0xf]
    %v223 = vld [vmem:[#allocation8 + $0x20] sm:$0xf]
    %v224 = vld [vmem:[#allocation8 + $0x24] sm:$0xf]
    %v225 = vld [vmem:[#allocation8 + $0x28] sm:$0xf]
    %v226 = vld [vmem:[#allocation8 + $0x2c] sm:$0xf]
    %v227 = vld [vmem:[#allocation8 + $0x30] sm:$0xf]
    %v228 = vld [vmem:[#allocation8 + $0x34] sm:$0xf]
    %v229 = vld [vmem:[#allocation8 + $0x38] sm:$0xf]
    %v230 = vld [vmem:[#allocation8 + $0x3c] sm:$0xf]
    %v231 = vld [vmem:[%s5] sm:$0x1]
    %v233 = vlaneseq
    %v234 = vshrl.u32 %v233, 7
    %v235 = vsub.s32 0, %v234
    %v236 = vrot.slane %v231, %v235
    %v254 = vunpack.c.l.b16 %v215
    %v255 = vunpack.c.l.b16 %v216
    %v256 = vunpack.c.l.b16 %v217
    %v257 = vunpack.c.l.b16 %v218
    %v258 = vunpack.c.l.b16 %v219
    %v259 = vunpack.c.l.b16 %v220
    %v260 = vunpack.c.l.b16 %v221
    %v261 = vunpack.c.l.b16 %v222
    %v262 = vunpack.c.l.b16 %v223
    %v263 = vunpack.c.l.b16 %v224
    %v264 = vunpack.c.l.b16 %v225
    %v265 = vunpack.c.l.b16 %v226
    %v266 = vunpack.c.l.b16 %v227
    %v267 = vunpack.c.l.b16 %v228
    %v268 = vunpack.c.l.b16 %v229
    %v269 = vunpack.c.l.b16 %v230
    %v270 = vpack.c.b16 %v255, %v254
    %v271 = vpack.c.b16 %v257, %v256
    %v272 = vpack.c.b16 %v259, %v258
    %v273 = vpack.c.b16 %v261, %v260
    %v274 = vpack.c.b16 %v263, %v262
    %v275 = vpack.c.b16 %v265, %v264
    %v276 = vpack.c.b16 %v267, %v266
    %v277 = vpack.c.b16 %v269, %v268
    %286 = vmatprep.subr.bf16.mxu0 0
    %287 = vmatpush1.bf16.msra.mxu0 %v277
    %288 = vmatprep.subr.bf16.mxu0 0
    %289 = vmatpush1.bf16.msra.mxu0 %v276
    %290 = vmatprep.subr.bf16.mxu0 0
    %291 = vmatpush1.bf16.msra.mxu0 %v275
    %292 = vmatprep.subr.bf16.mxu0 0
    %293 = vmatpush1.bf16.msra.mxu0 %v274
    %294 = vmatprep.subr.bf16.mxu0 0
    %295 = vmatpush1.bf16.msra.mxu0 %v273
    %296 = vmatprep.subr.bf16.mxu0 0
    %297 = vmatpush1.bf16.msra.mxu0 %v272
    %298 = vmatprep.subr.bf16.mxu0 0
    %299 = vmatpush1.bf16.msra.mxu0 %v271
    %300 = vmatprep.subr.bf16.mxu0 0
    %301 = vmatpush1.bf16.msra.mxu0 %v270
    %302 = vmatprep.subr.bf16.mxu0 0
    %303 = vmatpush2.bf16.msra.mxu0 0
    %304 = vmatprep.subr.bf16.mxu0 0
    %305 = vmatpush2.bf16.msra.mxu0 0
    %306 = vmatprep.subr.bf16.mxu0 0
    %307 = vmatpush2.bf16.msra.mxu0 0
    %308 = vmatprep.subr.bf16.mxu0 0
    %309 = vmatpush2.bf16.msra.mxu0 0
    %310 = vmatprep.subr.bf16.mxu0 0
    %311 = vmatpush2.bf16.msra.mxu0 0
    %312 = vmatprep.subr.bf16.mxu0 0
    %313 = vmatpush2.bf16.msra.mxu0 0
    %314 = vmatprep.subr.bf16.mxu0 0
    %315 = vmatpush2.bf16.msra.mxu0 0
    %316 = vmatprep.subr.bf16.mxu0 0
    %317 = vmatpush2.bf16.msra.mxu0 0
    %318 = vmatprep.mubr.bf16.mxu0 0
    %319 = vmatmul.mubr.bf16.gmra.mxu0 %v214
    %v320 = vpop.f32.mrf.mxu0
    %v321 = vadd.f32 %v236, %v320
    %v322 = vpop.f32.mrf.mxu0
    %v323 = vpop.f32.mrf.mxu0
    %v324 = vpop.f32.mrf.mxu0
    %325 = vdwg.mxu0
    %v326 = vld [vmem:[#allocation10] sm:$0xf]
    %v327 = vld [vmem:[#allocation10 + $0x4] sm:$0xf]
    %v328 = vld [vmem:[#allocation10 + $0x8] sm:$0xf]
    %v329 = vld [vmem:[#allocation10 + $0xc] sm:$0xf]
    %v330 = vld [vmem:[#allocation10 + $0x10] sm:$0xf]
    %v331 = vld [vmem:[#allocation10 + $0x14] sm:$0xf]
    %v332 = vld [vmem:[#allocation10 + $0x18] sm:$0xf]
    %v333 = vld [vmem:[#allocation10 + $0x1c] sm:$0xf]
    %v334 = vld [vmem:[#allocation10 + $0x20] sm:$0xf]
    %v335 = vld [vmem:[#allocation10 + $0x24] sm:$0xf]
    %v336 = vld [vmem:[#allocation10 + $0x28] sm:$0xf]
    %v337 = vld [vmem:[#allocation10 + $0x2c] sm:$0xf]
    %v338 = vld [vmem:[#allocation10 + $0x30] sm:$0xf]
    %v339 = vld [vmem:[#allocation10 + $0x34] sm:$0xf]
    %v340 = vld [vmem:[#allocation10 + $0x38] sm:$0xf]
    %v341 = vld [vmem:[#allocation10 + $0x3c] sm:$0xf]
    %v342 = vld [vmem:[%s7] sm:$0x1]
    %v344 = vlaneseq
    %v345 = vshrl.u32 %v344, 7
    %v346 = vsub.s32 0, %v345
    %v347 = vrot.slane %v342, %v346
    %v365 = vunpack.c.l.b16 %v326
    %v366 = vunpack.c.l.b16 %v327
    %v367 = vunpack.c.l.b16 %v328
    %v368 = vunpack.c.l.b16 %v329
    %v369 = vunpack.c.l.b16 %v330
    %v370 = vunpack.c.l.b16 %v331
    %v371 = vunpack.c.l.b16 %v332
    %v372 = vunpack.c.l.b16 %v333
    %v373 = vunpack.c.l.b16 %v334
    %v374 = vunpack.c.l.b16 %v335
    %v375 = vunpack.c.l.b16 %v336
    %v376 = vunpack.c.l.b16 %v337
    %v377 = vunpack.c.l.b16 %v338
    %v378 = vunpack.c.l.b16 %v339
    %v379 = vunpack.c.l.b16 %v340
    %v380 = vunpack.c.l.b16 %v341
    %v381 = vpack.c.b16 %v366, %v365
    %v382 = vpack.c.b16 %v368, %v367
    %v383 = vpack.c.b16 %v370, %v369
    %v384 = vpack.c.b16 %v372, %v371
    %v385 = vpack.c.b16 %v374, %v373
    %v386 = vpack.c.b16 %v376, %v375
    %v387 = vpack.c.b16 %v378, %v377
    %v388 = vpack.c.b16 %v380, %v379
    %397 = vmatprep.subr.bf16.mxu0 0
    %398 = vmatpush1.bf16.msra.mxu0 %v388
    %399 = vmatprep.subr.bf16.mxu0 0
    %400 = vmatpush1.bf16.msra.mxu0 %v387
    %401 = vmatprep.subr.bf16.mxu0 0
    %402 = vmatpush1.bf16.msra.mxu0 %v386
    %403 = vmatprep.subr.bf16.mxu0 0
    %404 = vmatpush1.bf16.msra.mxu0 %v385
    %405 = vmatprep.subr.bf16.mxu0 0
    %406 = vmatpush1.bf16.msra.mxu0 %v384
    %407 = vmatprep.subr.bf16.mxu0 0
    %408 = vmatpush1.bf16.msra.mxu0 %v383
    %409 = vmatprep.subr.bf16.mxu0 0
    %410 = vmatpush1.bf16.msra.mxu0 %v382
    %411 = vmatprep.subr.bf16.mxu0 0
    %412 = vmatpush1.bf16.msra.mxu0 %v381
    %413 = vmatprep.subr.bf16.mxu0 0
    %414 = vmatpush2.bf16.msra.mxu0 0
    %415 = vmatprep.subr.bf16.mxu0 0
    %416 = vmatpush2.bf16.msra.mxu0 0
    %417 = vmatprep.subr.bf16.mxu0 0
    %418 = vmatpush2.bf16.msra.mxu0 0
    %419 = vmatprep.subr.bf16.mxu0 0
    %420 = vmatpush2.bf16.msra.mxu0 0
    %421 = vmatprep.subr.bf16.mxu0 0
    %422 = vmatpush2.bf16.msra.mxu0 0
    %423 = vmatprep.subr.bf16.mxu0 0
    %424 = vmatpush2.bf16.msra.mxu0 0
    %425 = vmatprep.subr.bf16.mxu0 0
    %426 = vmatpush2.bf16.msra.mxu0 0
    %427 = vmatprep.subr.bf16.mxu0 0
    %428 = vmatpush2.bf16.msra.mxu0 0
    %429 = vmatprep.mubr.bf16.mxu0 0
    %430 = vmatmul.mubr.bf16.gmra.mxu0 %v214
    %v431 = vpop.f32.mrf.mxu0
    %v432 = vadd.f32 %v347, %v431
    %v433 = vpop.f32.mrf.mxu0
    %v434 = vpop.f32.mrf.mxu0
    %v435 = vpop.f32.mrf.mxu0
    %436 = vdwg.mxu0
    %v437 = vtanh.pop %v432
    %v438 = vld [vmem:[%s8] sm:$0x1]
    %v440 = vlaneseq
    %v441 = vshrl.u32 %v440, 7
    %v442 = vsub.s32 0, %v441
    %v443 = vrot.slane %v438, %v442
    %v445 = vmul.f32 %v437, %v443
    %v446 = vld [vmem:[#allocation5] sm:$0xff]
    %v447 = vmul.f32 %v445, 1.442695
    %v448 = vpow.pop %v447
    %v449 = vmul.f32 %v446, %v448
    %v450 = vadd.f32 %v449, %v321
    %451 = vst [vmem:[#allocation11] sm:$0xff] %v450
    %452 = vadd.xlane.f32.xlu0 %v445
    %v453 = vpop.xlane.xlu0 %452
    %454 = vst [vmem:[#allocation12] sm:$0xff] %v453
    // Predicated region
    $region58: #{tpu_custom_call.1} parent=1 // pred_check
      _
    $region59: #{tpu_custom_call.1} parent=1 // pred_check_branch
      %456 = sbr.rel (0) target = $region61
    $region60: #{tpu_custom_call.1} parent=1 // pred_region
      %s458 = ssub.s32 128, 128
      %459 = vsyncadd [#allocation4], %s458
      %s461 = sshll.u32 [#allocation11], 4
      %s462 = int_to_ptr.vmem [resolvable:$true] %s461
      %464 = dma.vmem_to_hbm [thread:$0]  %s462, 128, %s9, [#allocation4]
    $region61: #{tpu_custom_call.1} parent=1 // pred_fallthru
      _
    // Predicated region
    $region62: #{tpu_custom_call.1} parent=1 // pred_check
      _
    $region63: #{tpu_custom_call.1} parent=1 // pred_check_branch
      %466 = sbr.rel (0) target = $region65
    $region64: #{tpu_custom_call.1} parent=1 // pred_region
      %s468 = ssub.s32 128, 128
      %469 = vsyncadd [#allocation13], %s468
      %s471 = sshll.u32 [#allocation12], 4
      %s472 = int_to_ptr.vmem [resolvable:$true] %s471
      %474 = dma.vmem_to_hbm [thread:$0]  %s472, 128, %s10, [#allocation13]
    $region65: #{tpu_custom_call.1} parent=1 // pred_fallthru
      _
    // Predicated region
    $region66: #{tpu_custom_call.1} parent=1 // pred_check
      _
    $region67: #{tpu_custom_call.1} parent=1 // pred_check_branch
      %476 = sbr.rel (0) target = $region69
    $region68: #{tpu_custom_call.1} parent=1 // pred_region
      %477 = dma.done [#allocation4], 128
    $region69: #{tpu_custom_call.1} parent=1 // pred_fallthru
      _
    // Predicated region
    $region70: #{tpu_custom_call.1} parent=1 // pred_check
      _
    $region71: #{tpu_custom_call.1} parent=1 // pred_check_branch
      %479 = sbr.rel (0) target = $region73
    $region72: #{tpu_custom_call.1} parent=1 // pred_region
      %480 = dma.done [#allocation13], 128
    $region73: #{tpu_custom_call.1} parent=1 // pred_fallthru
      _
    %481 = vsyncpa [#allocation3], 1
    %482 = vsyncpa [#allocation6], 1
    %483 = vsyncpa [#allocation9], 1
    %484 = vsyncpa [#allocation4], 1
    %485 = vsyncpa [#allocation13], 1

</llo_original>
